<compile_context>
chip_gen: v7x
topology: tpu7x:2x2x1
jax: 0.10.0
libtpu: 0.0.40
codegen_flags: <defaults>
</compile_context>

<pallas_src>
import functools

import jax
import jax.numpy as jnp
from jax.experimental import pallas as pl
from jax.experimental.pallas import tpu as pltpu

LANE = 128
_TARGET_BLOCK_BYTES = 1 << 20  # ~1 MiB per input per grid step


def _sublane(dtype):
    # Native sublane tile: 8 for 4-byte, 16 for 2-byte, 32 for 1-byte dtypes.
    return {4: 8, 2: 16, 1: 32}.get(jnp.dtype(dtype).itemsize, 8)


def _round_up(a, b):
    return ((a + b - 1) // b) * b


def _as_lane_slab(a):
    """Flatten to a (rows, LANE) lane-dense slab (free bitcast when aligned)."""
    flat = a.reshape(-1)
    rem = flat.shape[0] % LANE
    if rem:
        # TODO(synk): rare ragged case (numel % 128 != 0) still pays a pad copy.
        flat = jnp.pad(flat, (0, LANE - rem))
    return flat.reshape(-1, LANE)


def _wmse_mean_kernel(x_ref, t_ref, w_ref, psum_ref, *, n_valid, block_rows,
                      needs_mask):
    """Per-block partial sums of weight * (x - t)^2, folded onto (8, LANE)."""
    x = x_ref[...].astype(jnp.float32)
    t = t_ref[...].astype(jnp.float32)
    w = w_ref[...].astype(jnp.float32)
    d = x - t
    wse = w * d * d
    if needs_mask:
        # Mask slab positions past the logical end (the partial last block
        # reads unspecified data). Element index fits int32 for < 2**31 elems.
        row0 = pl.program_id(0) * block_rows
        ridx = jax.lax.broadcasted_iota(jnp.int32, (block_rows, LANE), 0) + row0
        cidx = jax.lax.broadcasted_iota(jnp.int32, (block_rows, LANE), 1)
        wse = jnp.where(ridx * LANE + cidx < n_valid, wse, 0.0)
    # Fold all rows onto a single (8, LANE) tile: pure vreg adds on the VPU.
    psum_ref[...] = wse.reshape(block_rows // 8, 8, LANE).sum(axis=0)


def _wmse_elementwise_kernel(x_ref, t_ref, w_ref, o_ref):
    """Elementwise weight * (x - t)^2 (reduction='none')."""
    d = x_ref[...] - t_ref[...]
    o_ref[...] = w_ref[...] * d * d


@functools.partial(jax.jit, static_argnames="reduction")
def weighted_mse_loss(inputs, target, weight, reduction="mean"):
    assert inputs.shape == target.shape == weight.shape
    n = inputs.size
    dt = inputs.dtype

    x2 = _as_lane_slab(inputs)
    t2 = _as_lane_slab(target)
    w2 = _as_lane_slab(weight)
    rows = x2.shape[0]

    sub = _sublane(dt)
    target_rows = max(sub, _TARGET_BLOCK_BYTES // (LANE * jnp.dtype(dt).itemsize))
    block_rows = min(_round_up(rows, sub), _round_up(target_rows, sub))
    num_blocks = pl.cdiv(rows, block_rows)

    in_spec = pl.BlockSpec((block_rows, LANE), lambda i: (i, 0))
    cparams = pltpu.CompilerParams(
        dimension_semantics=("parallel",),
        vmem_limit_bytes=32 * 1024 * 1024,
    )

    if reduction == "mean":
        kernel = functools.partial(
            _wmse_mean_kernel,
            n_valid=n,
            block_rows=block_rows,
            needs_mask=(rows % block_rows != 0),
        )
        partials = pl.pallas_call(
            kernel,
            out_shape=jax.ShapeDtypeStruct((num_blocks * 8, LANE), jnp.float32),
            grid_spec=pltpu.PrefetchScalarGridSpec(
                num_scalar_prefetch=0,
                grid=(num_blocks,),
                in_specs=[in_spec, in_spec, in_spec],
                out_specs=pl.BlockSpec((8, LANE), lambda i: (i, 0)),
            ),
            compiler_params=cparams,
        )(x2, t2, w2)
        # Tiny final cross-lane reduce + 1/n scale; fuses under jit.
        return (jnp.sum(partials) * (1.0 / n)).astype(dt)

    # reduction != 'mean': elementwise WSE tensor.
    out = pl.pallas_call(
        _wmse_elementwise_kernel,
        out_shape=jax.ShapeDtypeStruct((rows, LANE), dt),
        grid_spec=pltpu.PrefetchScalarGridSpec(
            num_scalar_prefetch=0,
            grid=(num_blocks,),
            in_specs=[in_spec, in_spec, in_spec],
            out_specs=in_spec,
        ),
        compiler_params=cparams,
    )(x2, t2, w2)
    flat = out.reshape(-1)
    if flat.shape[0] != n:
        flat = flat[:n]
    return flat.reshape(inputs.shape)


if __name__ == "__main__":
    key = jax.random.PRNGKey(0)
    k1, k2, k3 = jax.random.split(key, 3)

    # Small NCHW-shaped tensors (B=2, C=4, H=16, W=16).
    shape = (2, 4, 16, 16)
    x = jax.random.normal(k1, shape, dtype=jnp.float32)
    t = jax.random.normal(k2, shape, dtype=jnp.float32)
    w = jax.random.uniform(k3, shape, dtype=jnp.float32)

    loss = weighted_mse_loss(x, t, w, reduction="mean")
    loss = jax.block_until_ready(loss)
    ref = jnp.mean(w * (x - t) ** 2)
    assert jnp.allclose(loss, ref, rtol=1e-5, atol=1e-6), (loss, ref)

    # Also exercise the reduction='none' (elementwise) path.
    wse = weighted_mse_loss(x, t, w, reduction="none")
    wse = jax.block_until_ready(wse)
    ref_e = w * (x - t) ** 2
    assert jnp.allclose(wse, ref_e, rtol=1e-5, atol=1e-6)

    print("KERNEL_OK")
</pallas_src>

<mosaic_0001>
module attributes {stable_mosaic.version = 11 : i64} {
  func.func @_wmse_mean_kernel(%arg0: i32, %arg1: memref<16x128xf32, #tpu.memory_space<vmem>>, %arg2: memref<16x128xf32, #tpu.memory_space<vmem>>, %arg3: memref<16x128xf32, #tpu.memory_space<vmem>>, %arg4: memref<8x128xf32, #tpu.memory_space<vmem>>) attributes {dimension_semantics = [#tpu.dimension_semantics<parallel>], iteration_bounds = array<i64: 1>, scalar_prefetch = 0 : i64, scratch_operands = 0 : i64, tpu.core_type = #tpu.core_type<tc>, window_params = [{transform_indices = @transform_0, window_bounds = array<i64: 16, 128>}, {transform_indices = @transform_1, window_bounds = array<i64: 16, 128>}, {transform_indices = @transform_2, window_bounds = array<i64: 16, 128>}, {transform_indices = @transform_3, window_bounds = array<i64: 8, 128>}]} {
    %c0 = arith.constant 0 : index
    %c0_0 = arith.constant 0 : index
    %0 = vector.load %arg1[%c0, %c0_0] : memref<16x128xf32, #tpu.memory_space<vmem>>, vector<16x128xf32>
    %c0_1 = arith.constant 0 : index
    %c0_2 = arith.constant 0 : index
    %1 = vector.load %arg2[%c0_1, %c0_2] : memref<16x128xf32, #tpu.memory_space<vmem>>, vector<16x128xf32>
    %c0_3 = arith.constant 0 : index
    %c0_4 = arith.constant 0 : index
    %2 = vector.load %arg3[%c0_3, %c0_4] : memref<16x128xf32, #tpu.memory_space<vmem>>, vector<16x128xf32>
    %3 = arith.subf %0, %1 : vector<16x128xf32>
    %4 = arith.mulf %2, %3 : vector<16x128xf32>
    %5 = arith.mulf %4, %3 : vector<16x128xf32>
    %6 = vector.shape_cast %5 : vector<16x128xf32> to vector<2x8x128xf32>
    %cst = arith.constant dense<0.000000e+00> : vector<8x128xf32>
    %7 = vector.multi_reduction <add>, %6, %cst [0] : vector<2x8x128xf32> to vector<8x128xf32>
    %c0_5 = arith.constant 0 : index
    %c0_6 = arith.constant 0 : index
    %8 = vector.load %arg4[%c0_5, %c0_6] : memref<8x128xf32, #tpu.memory_space<vmem>>, vector<8x128xf32>
    tpu.vector_store %arg4[%c0_5, %c0_6], %7 {strides = array<i32>} : memref<8x128xf32, #tpu.memory_space<vmem>>, vector<8x128xf32>,
    return
  }
  func.func @transform_0(%arg0: i32) -> (i32, i32) {
    %c0_i32 = arith.constant 0 : i32
    %c0_i32_0 = arith.constant 0 : i32
    return %arg0, %c0_i32 : i32, i32
  }
  func.func @transform_1(%arg0: i32) -> (i32, i32) {
    %c0_i32 = arith.constant 0 : i32
    %c0_i32_0 = arith.constant 0 : i32
    return %arg0, %c0_i32 : i32, i32
  }
  func.func @transform_2(%arg0: i32) -> (i32, i32) {
    %c0_i32 = arith.constant 0 : i32
    %c0_i32_0 = arith.constant 0 : i32
    return %arg0, %c0_i32 : i32, i32
  }
  func.func @transform_3(%arg0: i32) -> (i32, i32) {
    %c0_i32 = arith.constant 0 : i32
    %c0_i32_0 = arith.constant 0 : i32
    return %arg0, %c0_i32 : i32, i32
  }
}

</mosaic_0001>

<llo_original>
// kernel: weighted_mse_loss.1
$region0: #{weighted_mse_loss.1}
  #allocation0 [shape = 'u32[]', space=smem, size = 0x4, offset = 0x4, fixed_abs, tag = 'smem constant byte address 0x4 - core index']
  #allocation1 [shape = 'u32[144,128]{1,0:T(1,128)}', space=vmem, size = 0x12000, scoped, tag = 'internal scratch']
  %s0 = inlined_call_operand.vmem [shape: f32[16,128], index: 0, kind: input, shape index: {}]
  %s1 = inlined_call_operand.vmem [shape: f32[16,128], index: 1, kind: input, shape index: {}]
  %s2 = inlined_call_operand.vmem [shape: f32[16,128], index: 2, kind: input, shape index: {}]
  %s3 = inlined_call_operand.vmem [shape: f32[8,128], index: 3, kind: output, shape index: {}]
  %s4 = sld [smem:[#allocation0]]
  $region22: #{weighted_mse_loss.1} parent=0
    _
  %s6 = ssub.s32 1, %s4
  %s7 = scalar_select 0, %s6, %s4
  // Predicated region
  $region2: #{weighted_mse_loss.1} parent=0 // pred_check
    _
  $region3: #{weighted_mse_loss.1} parent=0 // pred_check_branch
    %9 = sbr.rel (0) target = $region5
  $region4: #{weighted_mse_loss.1} parent=0 // pred_region
    _
  $region5: #{weighted_mse_loss.1} parent=0 // pred_fallthru
    _
  // Predicated region
  $region6: #{weighted_mse_loss.1} parent=0 // pred_check
    _
  $region7: #{weighted_mse_loss.1} parent=0 // pred_check_branch
    %11 = sbr.rel (0) target = $region9
  $region8: #{weighted_mse_loss.1} parent=0 // pred_region
    _
  $region9: #{weighted_mse_loss.1} parent=0 // pred_fallthru
    _
  // Predicated region
  $region10: #{weighted_mse_loss.1} parent=0 // pred_check
    _
  $region11: #{weighted_mse_loss.1} parent=0 // pred_check_branch
    %13 = sbr.rel (0) target = $region13
  $region12: #{weighted_mse_loss.1} parent=0 // pred_region
    _
  $region13: #{weighted_mse_loss.1} parent=0 // pred_fallthru
    _
  %v14 = vld [vmem:[%s0] sm:$0xff]
  %v15 = vld [vmem:[%s0 + $0x8] sm:$0xff]
  %v16 = vld [vmem:[%s1] sm:$0xff]
  %v17 = vld [vmem:[%s1 + $0x8] sm:$0xff]
  %v18 = vld [vmem:[%s2] sm:$0xff]
  %v19 = vld [vmem:[%s2 + $0x8] sm:$0xff]
  %v20 = vsub.f32 %v14, %v16
  %v21 = vsub.f32 %v15, %v17
  %v22 = vmul.f32 %v18, %v20
  %v23 = vmul.f32 %v19, %v21
  %v24 = vmul.f32 %v22, %v20
  %v25 = vmul.f32 %v23, %v21
  %v26 = vadd.f32 %v24, %v25
  %27 = vst [vmem:[%s3] sm:$0xff] %v26
  // Predicated region
  $region14: #{weighted_mse_loss.1} parent=0 // pred_check
    _
  $region15: #{weighted_mse_loss.1} parent=0 // pred_check_branch
    %29 = sbr.rel (0) target = $region17
  $region16: #{weighted_mse_loss.1} parent=0 // pred_region
    _
  $region17: #{weighted_mse_loss.1} parent=0 // pred_fallthru
    _
  // Predicated region
  $region18: #{weighted_mse_loss.1} parent=0 // pred_check
    _
  $region19: #{weighted_mse_loss.1} parent=0 // pred_check_branch
    %31 = sbr.rel (0) target = $region21
  $region20: #{weighted_mse_loss.1} parent=0 // pred_region
    _
  $region21: #{weighted_mse_loss.1} parent=0 // pred_fallthru
    _

</llo_original>
